<compile_context>
chip_gen: v6e
topology: v6e:2x2x1
jax: 0.10.0
libtpu: 0.0.40
codegen_flags: <defaults>
</compile_context>

<pallas_src>
import functools

import jax
import jax.numpy as jnp
from jax.experimental import pallas as pl
from jax.experimental.pallas import tpu as pltpu


def _nonlocal_kernel(x_ref, w_all_ref, wz_ref, o_ref, *,
                     in_channels, inner_channels, pooled, t_img, n_img):
    c = in_channels
    ic = inner_channels
    pp = pooled

    x = x_ref[0]                                            # (C+1, nb*T) f32
    w_all = w_all_ref[...].astype(jnp.bfloat16)             # (3IC+1, C+1)
    wz = wz_ref[...].astype(jnp.bfloat16)                   # (C, IC+1)

    # Fused theta/phi/g 1x1 convs for every image in this block: one bf16 MXU
    # matmul (f32 accumulation).  Biases are folded in via the ones channel
    # appended to x; the last output row of `proj` is the constant 1 used to
    # fold b_z into the final matmul.
    proj = jnp.dot(w_all, x.astype(jnp.bfloat16),
                   preferred_element_type=jnp.float32)      # (3IC+1, nb*T)

    outs = []
    # Static (unrolled) per-image loop: n_img is small and static offsets keep
    # every slice aligned to a multiple of T (multiple of 128 lanes).
    for j in range(n_img):
        lo = j * t_img
        hi = lo + t_img
        theta = proj[:ic, lo:hi]                            # (IC, T), IC^-0.5 folded
        phi_full = proj[ic:2 * ic, lo:hi]                   # (IC, T)
        ge_full = proj[2 * ic:, lo:hi]                      # (IC+1, T), row IC == 1

        # 2x2 max pool after the 1x1 convs: lanes are ordered
        # [pixel 0 of every window | pixel 1 | pixel 2 | pixel 3], so the pool
        # is an elementwise max of four static lane slices.
        phi = phi_full[:, :pp]
        ge = ge_full[:, :pp]
        for k in range(1, 4):
            phi = jnp.maximum(phi, phi_full[:, k * pp:(k + 1) * pp])   # (IC, P)
            ge = jnp.maximum(ge, ge_full[:, k * pp:(k + 1) * pp])      # (IC+1, P)

        # logits f[p, t] = sum_c phi[c, p] * theta[c, t]  (scale pre-folded).
        f = jax.lax.dot_general(
            phi.astype(jnp.bfloat16), theta.astype(jnp.bfloat16),
            (((0,), (0,)), ((), ())),
            preferred_element_type=jnp.float32)             # (P, T)

        # Softmax over the pooled axis; normalization is deferred until after
        # the aggregation matmul.  Elementwise math stays f32 (v5e-safe).
        f = f - jnp.max(f, axis=0, keepdims=True)
        e = jnp.exp(f)                                      # (P, T) f32

        # y_un[i, t] = sum_p ge[i, p] * e[p, t]; the constant-ones row of `ge`
        # makes row IC the softmax denominator (no separate XLU reduction).
        y_un = jnp.dot(ge.astype(jnp.bfloat16), e.astype(jnp.bfloat16),
                       preferred_element_type=jnp.float32)  # (IC+1, T)
        inv = pl.reciprocal(y_un[ic:ic + 1, :], approx=False)   # (1, T) exact
        y = y_un * inv                                      # row IC ~= 1 -> b_z

        # w_z 1x1 conv with inference-mode BatchNorm affine and b_z folded in.
        w = jnp.dot(wz, y.astype(jnp.bfloat16),
                    preferred_element_type=jnp.float32)     # (C, T)

        outs.append(w + x[:c, lo:hi])                       # residual

    out = outs[0] if n_img == 1 else jnp.concatenate(outs, axis=-1)
    o_ref[0] = out.astype(o_ref.dtype)


def nonlocal_embedded_gaussian(x_nchw, params):
    N, C, H, W = x_nchw.shape
    assert H % 2 == 0 and W % 2 == 0, "2x2 max-pool needs even spatial dims"
    IC = params["w_theta"].shape[1]
    T = H * W
    Hp, Wp = H // 2, W // 2
    P = Hp * Wp

    # ---- images per grid step ----------------------------------------------
    # Merge batch elements along the lane axis to amortize the ~0.35us/step
    # pipeline overhead, but keep >= 2 grid chunks when possible (v7x shards
    # "parallel" grid axes across its 2 TensorCores) and cap the lane width.
    max_nb = max(1, 4096 // T)
    nb = 1
    for cand in range(max_nb, 0, -1):
        if N % cand == 0 and (N // cand) >= min(N, 2):
            nb = cand
            break
    n_steps = N // nb

    # ---- layout plumbing (wrapper-side only, no compute) ---------------------
    # Channels-first, 2x2-window permuted spatial order: t' = k*P + p with
    # k = pixel index inside the pooling window, p = pooled position.  A ones
    # channel is appended so the projection biases fold into the matmul.
    x_perm = x_nchw.reshape(N, C, Hp, 2, Wp, 2)
    x_perm = jnp.transpose(x_perm, (0, 1, 3, 5, 2, 4)).reshape(N, C, T)
    x_ext = jnp.concatenate(
        [x_perm, jnp.ones((N, 1, T), x_perm.dtype)], axis=1)       # (N, C+1, T)
    x_ext = x_ext.reshape(n_steps, nb, C + 1, T)
    x_ext = jnp.transpose(x_ext, (0, 2, 1, 3)).reshape(n_steps, C + 1, nb * T)

    # ---- host-side weight folding --------------------------------------------
    eps = 1e-5
    inv_std = 1.0 / jnp.sqrt(params["bn_var"] + eps)
    bn_scale = params["bn_gamma"] * inv_std
    bn_shift = params["bn_beta"] - params["bn_mean"] * bn_scale

    scale = float(IC) ** -0.5
    # Fused projection weight (3IC+1, C+1): rows = [theta (pre-scaled by
    # IC^-0.5); phi; g; constant-1 row], last column = biases (ones channel).
    w_rows = jnp.concatenate([params["w_theta"].T * scale,
                              params["w_phi"].T,
                              params["w_g"].T,
                              jnp.zeros((1, C), jnp.float32)], axis=0)
    b_rows = jnp.concatenate([params["b_theta"] * scale,
                              params["b_phi"],
                              params["b_g"],
                              jnp.ones((1,), jnp.float32)], axis=0)
    w_all = jnp.concatenate([w_rows, b_rows[:, None]], axis=1)     # (3IC+1, C+1)

    # w_z with the BatchNorm affine folded in; (BN-folded) b_z as last column,
    # multiplying the constant-1 row of the normalized y inside the kernel.
    wz = params["w_z"].T * bn_scale[:, None]                       # (C, IC)
    bz = params["b_z"] * bn_scale + bn_shift                       # (C,)
    wz_all = jnp.concatenate([wz, bz[:, None]], axis=1)            # (C, IC+1)

    # ---- VMEM budget (generation-aware cap, explicit headroom) ----------------
    try:
        cap = int(pltpu.get_tpu_info().vmem_capacity_bytes)
    except Exception:  # interpret mode / older runtimes
        cap = 128 * 2 ** 20
    elem = 4
    tb = nb * T
    working = elem * (2 * (C + 1) * tb + 2 * C * tb     # double-buffered x / out
                      + (3 * IC + 1) * tb               # fused projection
                      + 2 * P * T                       # logits + exponentials
                      + (IC + 1) * T + C * T)           # y, w (per image)
    working += elem * ((3 * IC + 1) * (C + 1) + C * (IC + 1))   # resident weights
    gen_cap = min(48 * 2 ** 20, cap // 2)               # ~48 MiB v5e/v6e, 32 MiB v7x
    vmem_limit = int(min(gen_cap, max(32 * 2 ** 20, 2 * working)))

    kernel = functools.partial(_nonlocal_kernel, in_channels=C,
                               inner_channels=IC, pooled=P, t_img=T, n_img=nb)

    out_packed = pl.pallas_call(
        kernel,
        out_shape=jax.ShapeDtypeStruct((n_steps, C, nb * T), x_nchw.dtype),
        grid=(n_steps,),
        in_specs=[
            pl.BlockSpec((1, C + 1, nb * T), lambda s: (s, 0, 0)),  # x (+ ones)
            pl.BlockSpec((3 * IC + 1, C + 1), lambda s: (0, 0)),    # fused W|b
            pl.BlockSpec((C, IC + 1), lambda s: (0, 0)),            # w_z|b_z (BN)
        ],
        out_specs=pl.BlockSpec((1, C, nb * T), lambda s: (s, 0, 0)),
        compiler_params=pltpu.CompilerParams(
            dimension_semantics=("parallel",),
            vmem_limit_bytes=vmem_limit),
    )(x_ext, w_all, wz_all)

    # Undo the batch packing and window permutation (layout plumbing only).
    out = out_packed.reshape(n_steps, C, nb, T)
    out = jnp.transpose(out, (0, 2, 1, 3)).reshape(N, C, T)
    out = out.reshape(N, C, 2, 2, Hp, Wp)
    out = jnp.transpose(out, (0, 1, 4, 2, 5, 3)).reshape(N, C, H, W)
    return out


def nonlocal_reference(x_nchw, params):
    """Pure-JAX (f32) reference of the PyTorch forward (inference-mode BN)."""
    N, C, H, W = x_nchw.shape
    IC = params["w_theta"].shape[1]
    x_nhwc = jnp.transpose(x_nchw, (0, 2, 3, 1))

    def conv1x1(x, w, b):
        return jnp.einsum("nhwc,co->nhwo", x, w) + b

    def pool2x2(x):
        n, h, w_, oc = x.shape
        return jnp.max(x.reshape(n, h // 2, 2, w_ // 2, 2, oc), axis=(2, 4))

    theta = conv1x1(x_nhwc, params["w_theta"], params["b_theta"]).reshape(N, -1, IC)
    phi = pool2x2(conv1x1(x_nhwc, params["w_phi"], params["b_phi"])).reshape(N, -1, IC)
    g = pool2x2(conv1x1(x_nhwc, params["w_g"], params["b_g"])).reshape(N, -1, IC)

    f = jnp.einsum("ntc,npc->ntp", theta, phi) * (IC ** -0.5)
    attn = jax.nn.softmax(f, axis=-1)
    y = jnp.einsum("ntp,npc->ntc", attn, g)

    w = jnp.einsum("nti,io->nto", y, params["w_z"]) + params["b_z"]
    eps = 1e-5
    w = ((w - params["bn_mean"]) / jnp.sqrt(params["bn_var"] + eps)
         * params["bn_gamma"] + params["bn_beta"])
    z = w + x_nhwc.reshape(N, -1, C)
    return jnp.transpose(z.reshape(N, H, W, C), (0, 3, 1, 2))


if __name__ == "__main__":
    N, C, H, W = 2, 4, 16, 16
    IC = max(C // 2, 1)

    key = jax.random.PRNGKey(0)
    kx, k0, k1, k2, k3, k4, k5, k6, k7 = jax.random.split(key, 9)

    std_inner = (2.0 / IC) ** 0.5     # kaiming_normal_(mode='fan_out'), 1x1 conv
    std_out = (2.0 / C) ** 0.5

    params = dict(
        w_theta=jax.random.normal(k0, (C, IC), jnp.float32) * std_inner,
        w_phi=jax.random.normal(k1, (C, IC), jnp.float32) * std_inner,
        w_g=jax.random.normal(k2, (C, IC), jnp.float32) * std_inner,
        w_z=jax.random.normal(k3, (IC, C), jnp.float32) * std_out,
        b_theta=jax.random.normal(k4, (IC,), jnp.float32) * 0.1,
        b_phi=jax.random.normal(k5, (IC,), jnp.float32) * 0.1,
        b_g=jax.random.normal(k6, (IC,), jnp.float32) * 0.1,
        b_z=jax.random.normal(k7, (C,), jnp.float32) * 0.1,
        # BatchNorm (inference mode).  zero_init_final_norm=False -> gamma=1.
        bn_gamma=jnp.ones((C,), jnp.float32),
        bn_beta=jnp.zeros((C,), jnp.float32),
        bn_mean=jnp.zeros((C,), jnp.float32),
        bn_var=jnp.ones((C,), jnp.float32),
    )

    x = jax.random.normal(kx, (N, C, H, W), jnp.float32)

    z = nonlocal_embedded_gaussian(x, params)
    z = jax.block_until_ready(z)

    z_ref = jax.block_until_ready(nonlocal_reference(x, params))
    assert z.shape == (N, C, H, W)
    # All four matmuls use bf16 MXU operands (f32 accumulation), so agreement
    # with the all-f32 reference is at the bf16 level for this random std~1
    # init (logits pass through a softmax, which amplifies operand rounding):
    # ~1e-2 rms, with a loose per-element bound for rare tail elements.
    err = jnp.abs(z - z_ref)
    tol = 1.5e-1 + 1e-1 * jnp.abs(z_ref)
    assert bool(jnp.all(err <= tol)), f"max abs err {float(jnp.max(err)):.3e}"
    assert float(jnp.mean(err)) < 5e-2, f"mean abs err {float(jnp.mean(err)):.3e}"

    print("KERNEL_OK")
</pallas_src>

<mosaic_0001>
module attributes {stable_mosaic.version = 11 : i64} {
  func.func @_nonlocal_kernel(%arg0: i32, %arg1: memref<1x5x256xf32, #tpu.memory_space<vmem>>, %arg2: memref<7x5xf32, #tpu.memory_space<vmem>>, %arg3: memref<4x3xf32, #tpu.memory_space<vmem>>, %arg4: memref<1x4x256xf32, #tpu.memory_space<vmem>>) attributes {dimension_semantics = [#tpu.dimension_semantics<parallel>], iteration_bounds = array<i64: 2>, scalar_prefetch = 0 : i64, scratch_operands = 0 : i64, tpu.core_type = #tpu.core_type<tc>, window_params = [{transform_indices = @transform_0, window_bounds = array<i64: 1, 5, 256>}, {pipeline_mode = #tpu.pipeline_mode<synchronous>, transform_indices = @transform_1, window_bounds = array<i64: 7, 5>}, {pipeline_mode = #tpu.pipeline_mode<synchronous>, transform_indices = @transform_2, window_bounds = array<i64: 4, 3>}, {transform_indices = @transform_3, window_bounds = array<i64: 1, 4, 256>}]} {
    %c0 = arith.constant 0 : index
    %c0_0 = arith.constant 0 : index
    %c0_1 = arith.constant 0 : index
    %0 = vector.load %arg1[%c0, %c0_0, %c0_1] : memref<1x5x256xf32, #tpu.memory_space<vmem>>, vector<1x5x256xf32>
    %1 = vector.shape_cast %0 : vector<1x5x256xf32> to vector<5x256xf32>
    %c0_2 = arith.constant 0 : index
    %c0_3 = arith.constant 0 : index
    %2 = vector.load %arg2[%c0_2, %c0_3] : memref<7x5xf32, #tpu.memory_space<vmem>>, vector<7x5xf32>
    %3 = arith.truncf %2 : vector<7x5xf32> to vector<7x5xbf16>
    %c0_4 = arith.constant 0 : index
    %c0_5 = arith.constant 0 : index
    %4 = vector.load %arg3[%c0_4, %c0_5] : memref<4x3xf32, #tpu.memory_space<vmem>>, vector<4x3xf32>
    %5 = arith.truncf %4 : vector<4x3xf32> to vector<4x3xbf16>
    %6 = arith.truncf %1 : vector<5x256xf32> to vector<5x256xbf16>
    %cst = arith.constant dense<0.000000e+00> : vector<7x256xf32>
    %7 = tpu.matmul %3, %6, %cst {dimension_numbers = #tpu.dot_dimension_numbers<[1], [0], [0], [1], [0, 0, 1, 1], [], []>} : vector<7x5xbf16>, vector<5x256xbf16>, vector<7x256xf32> -> vector<7x256xf32>
    %8 = vector.extract_strided_slice %7 {offsets = [0, 0], sizes = [2, 256], strides = [1, 1]} : vector<7x256xf32> to vector<2x256xf32>
    %9 = vector.extract_strided_slice %7 {offsets = [2, 0], sizes = [2, 256], strides = [1, 1]} : vector<7x256xf32> to vector<2x256xf32>
    %10 = vector.extract_strided_slice %7 {offsets = [4, 0], sizes = [3, 256], strides = [1, 1]} : vector<7x256xf32> to vector<3x256xf32>
    %11 = vector.extract_strided_slice %9 {offsets = [0, 0], sizes = [2, 64], strides = [1, 1]} : vector<2x256xf32> to vector<2x64xf32>
    %12 = vector.extract_strided_slice %10 {offsets = [0, 0], sizes = [3, 64], strides = [1, 1]} : vector<3x256xf32> to vector<3x64xf32>
    %13 = vector.extract_strided_slice %9 {offsets = [0, 64], sizes = [2, 64], strides = [1, 1]} : vector<2x256xf32> to vector<2x64xf32>
    %14 = arith.maximumf %11, %13 : vector<2x64xf32>
    %15 = vector.extract_strided_slice %10 {offsets = [0, 64], sizes = [3, 64], strides = [1, 1]} : vector<3x256xf32> to vector<3x64xf32>
    %16 = arith.maximumf %12, %15 : vector<3x64xf32>
    %17 = vector.extract_strided_slice %9 {offsets = [0, 128], sizes = [2, 64], strides = [1, 1]} : vector<2x256xf32> to vector<2x64xf32>
    %18 = arith.maximumf %14, %17 : vector<2x64xf32>
    %19 = vector.extract_strided_slice %10 {offsets = [0, 128], sizes = [3, 64], strides = [1, 1]} : vector<3x256xf32> to vector<3x64xf32>
    %20 = arith.maximumf %16, %19 : vector<3x64xf32>
    %21 = vector.extract_strided_slice %9 {offsets = [0, 192], sizes = [2, 64], strides = [1, 1]} : vector<2x256xf32> to vector<2x64xf32>
    %22 = arith.maximumf %18, %21 : vector<2x64xf32>
    %23 = vector.extract_strided_slice %10 {offsets = [0, 192], sizes = [3, 64], strides = [1, 1]} : vector<3x256xf32> to vector<3x64xf32>
    %24 = arith.maximumf %20, %23 : vector<3x64xf32>
    %25 = arith.truncf %22 : vector<2x64xf32> to vector<2x64xbf16>
    %26 = arith.truncf %8 : vector<2x256xf32> to vector<2x256xbf16>
    %cst_6 = arith.constant dense<0.000000e+00> : vector<64x256xf32>
    %27 = tpu.matmul %25, %26, %cst_6 {dimension_numbers = #tpu.dot_dimension_numbers<[0], [0], [1], [1], [0, 1, 1, 1], [], []>} : vector<2x64xbf16>, vector<2x256xbf16>, vector<64x256xf32> -> vector<64x256xf32>
    %cst_7 = arith.constant dense<0xFF800000> : vector<256xf32>
    %28 = vector.multi_reduction <maximumf>, %27, %cst_7 [0] : vector<64x256xf32> to vector<256xf32>
    %29 = vector.shape_cast %28 : vector<256xf32> to vector<1x256xf32>
    %30 = vector.broadcast %29 : vector<1x256xf32> to vector<64x256xf32>
    %31 = arith.subf %27, %30 : vector<64x256xf32>
    %32 = math.exp %31 : vector<64x256xf32>
    %33 = arith.truncf %24 : vector<3x64xf32> to vector<3x64xbf16>
    %34 = arith.truncf %32 : vector<64x256xf32> to vector<64x256xbf16>
    %cst_8 = arith.constant dense<0.000000e+00> : vector<3x256xf32>
    %35 = tpu.matmul %33, %34, %cst_8 {dimension_numbers = #tpu.dot_dimension_numbers<[1], [0], [0], [1], [0, 0, 1, 1], [], []>} : vector<3x64xbf16>, vector<64x256xbf16>, vector<3x256xf32> -> vector<3x256xf32>
    %36 = vector.extract_strided_slice %35 {offsets = [2, 0], sizes = [1, 256], strides = [1, 1]} : vector<3x256xf32> to vector<1x256xf32>
    %37 = tpu.reciprocal %36 : vector<1x256xf32> -> vector<1x256xf32>
    %38 = vector.broadcast %37 : vector<1x256xf32> to vector<3x256xf32>
    %39 = arith.mulf %35, %38 : vector<3x256xf32>
    %40 = arith.truncf %39 : vector<3x256xf32> to vector<3x256xbf16>
    %cst_9 = arith.constant dense<0.000000e+00> : vector<4x256xf32>
    %41 = tpu.matmul %5, %40, %cst_9 {dimension_numbers = #tpu.dot_dimension_numbers<[1], [0], [0], [1], [0, 0, 1, 1], [], []>} : vector<4x3xbf16>, vector<3x256xbf16>, vector<4x256xf32> -> vector<4x256xf32>
    %42 = vector.extract_strided_slice %1 {offsets = [0, 0], sizes = [4, 256], strides = [1, 1]} : vector<5x256xf32> to vector<4x256xf32>
    %43 = arith.addf %41, %42 : vector<4x256xf32>
    %c0_10 = arith.constant 0 : index
    %c0_11 = arith.constant 0 : index
    %c0_12 = arith.constant 0 : index
    %44 = vector.load %arg4[%c0_10, %c0_11, %c0_12] : memref<1x4x256xf32, #tpu.memory_space<vmem>>, vector<1x4x256xf32>
    %45 = vector.shape_cast %44 : vector<1x4x256xf32> to vector<4x256xf32>
    %46 = vector.shape_cast %43 : vector<4x256xf32> to vector<1x4x256xf32>
    tpu.vector_store %arg4[%c0_10, %c0_11, %c0_12], %46 {strides = array<i32>} : memref<1x4x256xf32, #tpu.memory_space<vmem>>, vector<1x4x256xf32>,
    return
  }
  func.func @transform_0(%arg0: i32) -> (i32, i32, i32) {
    %c0_i32 = arith.constant 0 : i32
    %c0_i32_0 = arith.constant 0 : i32
    %c0_i32_1 = arith.constant 0 : i32
    return %arg0, %c0_i32, %c0_i32_0 : i32, i32, i32
  }
  func.func @transform_1(%arg0: i32) -> (i32, i32) {
    %c0_i32 = arith.constant 0 : i32
    %c0_i32_0 = arith.constant 0 : i32
    %c0_i32_1 = arith.constant 0 : i32
    return %c0_i32, %c0_i32_0 : i32, i32
  }
  func.func @transform_2(%arg0: i32) -> (i32, i32) {
    %c0_i32 = arith.constant 0 : i32
    %c0_i32_0 = arith.constant 0 : i32
    %c0_i32_1 = arith.constant 0 : i32
    return %c0_i32, %c0_i32_0 : i32, i32
  }
  func.func @transform_3(%arg0: i32) -> (i32, i32, i32) {
    %c0_i32 = arith.constant 0 : i32
    %c0_i32_0 = arith.constant 0 : i32
    %c0_i32_1 = arith.constant 0 : i32
    return %arg0, %c0_i32, %c0_i32_0 : i32, i32, i32
  }
}

</mosaic_0001>

<llo_original>
// kernel: tpu_custom_call.1
$region0: #{tpu_custom_call.1}
  #allocation0 [shape = 'u32[]', space=smem, size = 0x4, offset = 0x4, fixed_abs, tag = 'smem constant byte address 0x4 - core index']
  #allocation1 [shape = 'u32[144,128]{1,0:T(1,128)}', space=vmem, size = 0x12000, scoped, tag = 'internal scratch']
  %s0 = inlined_call_operand.vmem [shape: f32[2,5,256], index: 0, kind: input, shape index: {}]
  %s1 = inlined_call_operand.vmem [shape: f32[7,5], index: 1, kind: input, shape index: {}]
  %s2 = inlined_call_operand.vmem [shape: f32[4,3], index: 2, kind: input, shape index: {}]
  %s3 = inlined_call_operand.hbm [shape: f32[2,4,256], index: 3, kind: output, shape index: {}]
  %s4 = sld [smem:[#allocation0]]
  $region45: #{tpu_custom_call.1} parent=0
    _
  %s6 = ssub.s32 1, %s4
  %s7 = scalar_select 0, %s6, %s4
  $region1: #{tpu_custom_call.1} parent=0
    #allocation2 [shape = 'u8[8192]{0}', space=vmem, size = 0x2000, scoped, tag = 'output window, operand 0']
    #allocation3 [shape = 's32[2]{0}', space=sflag, size = 0x8, scoped, tag = 'scoped memory for tpu_custom_call.1']
    %8 = vsyncpa [#allocation3], 0
    %s9 = scalar_lea.sflag [#allocation3], 1
    %10 = vsyncpa %s9, 0
    loop: start=0, step=1, limit=4
    $region2: #{tpu_custom_call.1} parent=1 // loop_pre_header
      _
    $region3: #{tpu_custom_call.1} parent=1 // loop_header
      %s12 = sphi 0, %s16
      %p13 = scmp.ge.s32.totalorder %s12, 4
      %s22 = sphi 0, %s24
      %s25 = sphi 0, %s22
      %s26 = sphi 0, %s25
      %s42 = sphi 0, %s26
      %s46 = sphi 0, %s46
      %s48 = sphi 0, %s46
      %s49 = sphi 0, %s48
      %s63 = sphi 0, %s49
      %s67 = sphi 0, %s67
      %s69 = sphi 0, %s67
      %s70 = sphi 0, %s69
      %s84 = sphi 0, %s70
      %s90 = sphi 0, %s92
      %s93 = sphi 0, %s90
      %s94 = sphi 0, %s93
      %s110 = sphi 0, %s94
    $region4: #{tpu_custom_call.1} parent=1 // loop_header_branch
      %15 = sbr.rel (%p13) target = $region8
    $region5: #{tpu_custom_call.1} parent=1 // loop_body
      %s17 = ssub.s32 %s12, 1
      %s18 = ssub.s32 %s12, 2
      %s19 = sadd.s32 %s12, 1
      %s20 = ssub.s32 %s12, %s19
      %p21 = scmp.eq.s32.totalorder %s20, 0
      %s23 = sadd.s32 %s22, 1
      %s24 = scalar_select %p21, %s22, %s23
      %p27 = pneg %p21
      %p28 = scmp.eq.s32.totalorder %s12, 1
      %p29 = por %p27, %p28
      %p30 = scmp.ne.s32.totalorder %s22, %s25
      %p31 = scmp.eq.s32.totalorder %s12, 0
      %p32 = por %p30, %p31
      %p33 = scmp.ne.s32.totalorder %s22, %s25
      %p34 = scmp.eq.s32.totalorder %s17, 1
      %p35 = por %p33, %p34
      %p36 = scmp.ne.s32.totalorder %s25, %s26
      %p37 = scmp.eq.s32.totalorder %s17, 0
      %p38 = por %p36, %p37
      %p39 = scmp.ne.s32.totalorder %s25, %s26
      %p40 = scmp.eq.s32.totalorder %s18, 1
      %p41 = por %p39, %p40
      %p43 = scmp.ne.s32.totalorder %s26, %s42
      %p44 = scmp.eq.s32.totalorder %s18, 0
      %p45 = por %p43, %p44
      %s47 = sadd.s32 %s46, 1
      %p50 = scmp.eq.s32.totalorder %s12, 1
      %p51 = scmp.ne.s32.totalorder %s46, %s48
      %p52 = scmp.eq.s32.totalorder %s12, 0
      %p53 = por %p51, %p52
      %p54 = scmp.ne.s32.totalorder %s46, %s48
      %p55 = scmp.eq.s32.totalorder %s17, 1
      %p56 = por %p54, %p55
      %p57 = scmp.ne.s32.totalorder %s48, %s49
      %p58 = scmp.eq.s32.totalorder %s17, 0
      %p59 = por %p57, %p58
      %p60 = scmp.ne.s32.totalorder %s48, %s49
      %p61 = scmp.eq.s32.totalorder %s18, 1
      %p62 = por %p60, %p61
      %p64 = scmp.ne.s32.totalorder %s49, %s63
      %p65 = scmp.eq.s32.totalorder %s18, 0
      %p66 = por %p64, %p65
      %s68 = sadd.s32 %s67, 1
      %p71 = scmp.eq.s32.totalorder %s12, 1
      %p72 = scmp.ne.s32.totalorder %s67, %s69
      %p73 = scmp.eq.s32.totalorder %s12, 0
      %p74 = por %p72, %p73
      %p75 = scmp.ne.s32.totalorder %s67, %s69
      %p76 = scmp.eq.s32.totalorder %s17, 1
      %p77 = por %p75, %p76
      %p78 = scmp.ne.s32.totalorder %s69, %s70
      %p79 = scmp.eq.s32.totalorder %s17, 0
      %p80 = por %p78, %p79
      %p81 = scmp.ne.s32.totalorder %s69, %s70
      %p82 = scmp.eq.s32.totalorder %s18, 1
      %p83 = por %p81, %p82
      %p85 = scmp.ne.s32.totalorder %s70, %s84
      %p86 = scmp.eq.s32.totalorder %s18, 0
      %p87 = por %p85, %p86
      %s88 = ssub.s32 %s12, %s19
      %p89 = scmp.eq.s32.totalorder %s88, 0
      %s91 = sadd.s32 %s90, 1
      %s92 = scalar_select %p89, %s90, %s91
      %p95 = pneg %p89
      %p96 = scmp.eq.s32.totalorder %s12, 1
      %p97 = por %p95, %p96
      %p98 = scmp.ne.s32.totalorder %s90, %s93
      %p99 = scmp.eq.s32.totalorder %s12, 0
      %p100 = por %p98, %p99
      %p101 = scmp.ne.s32.totalorder %s90, %s93
      %p102 = scmp.eq.s32.totalorder %s17, 1
      %p103 = por %p101, %p102
      %p104 = scmp.ne.s32.totalorder %s93, %s94
      %p105 = scmp.eq.s32.totalorder %s17, 0
      %p106 = por %p104, %p105
      %p107 = scmp.ne.s32.totalorder %s93, %s94
      %p108 = scmp.eq.s32.totalorder %s18, 1
      %p109 = por %p107, %p108
      %p111 = scmp.ne.s32.totalorder %s94, %s110
      %p112 = scmp.eq.s32.totalorder %s18, 0
      %p113 = por %p111, %p112
      %p114 = scmp.le.s32.totalorder 1, %s12
      %p115 = scmp.lt.s32.totalorder %s12, 3
      %p116 = pnand %p114, %p115
      %p117 = pneg %p116
      // Predicated region
      $region9: #{tpu_custom_call.1} parent=5 // pred_check
        _
      $region10: #{tpu_custom_call.1} parent=5 // pred_check_branch
        %119 = sbr.rel (%p116) target = $region12
      $region11: #{tpu_custom_call.1} parent=5 // pred_region
        %s120 = ssub.s32 %s12, 1
        // Predicated region
        $region13: #{tpu_custom_call.1} parent=11 // pred_check
          %p121 = pneg %p59
        $region14: #{tpu_custom_call.1} parent=11 // pred_check_branch
          %123 = sbr.rel (%p121) target = $region16
        $region15: #{tpu_custom_call.1} parent=11 // pred_region
          _
        $region16: #{tpu_custom_call.1} parent=11 // pred_fallthru
          _
        // Predicated region
        $region17: #{tpu_custom_call.1} parent=11 // pred_check
          %p124 = pneg %p80
        $region18: #{tpu_custom_call.1} parent=11 // pred_check_branch
          %126 = sbr.rel (%p124) target = $region20
        $region19: #{tpu_custom_call.1} parent=11 // pred_region
          _
        $region20: #{tpu_custom_call.1} parent=11 // pred_fallthru
          _
      $region12: #{tpu_custom_call.1} parent=5 // pred_fallthru
        _
      %p127 = scmp.lt.s32.totalorder %s12, 2
      // Predicated region
      $region21: #{tpu_custom_call.1} parent=5 // pred_check
        %p128 = pneg %p127
      $region22: #{tpu_custom_call.1} parent=5 // pred_check_branch
        %130 = sbr.rel (%p128) target = $region24
      $region23: #{tpu_custom_call.1} parent=5 // pred_region
        // Predicated region
        $region25: #{tpu_custom_call.1} parent=23 // pred_check
          %p131 = pneg %p32
        $region26: #{tpu_custom_call.1} parent=23 // pred_check_branch
          %133 = sbr.rel (%p131) target = $region28
        $region27: #{tpu_custom_call.1} parent=23 // pred_region
          %p134 = scmp.lt.s32.totalorder %s12, 1
          %s135 = scalar_select %p134, %s12, 1
          %s136 = smul.addr %s135, 2
          %s137 = smul.addr %s136, 8
          %s138 = scalar_lea.vmem %s0, %s137
        $region28: #{tpu_custom_call.1} parent=23 // pred_fallthru
          _
      $region24: #{tpu_custom_call.1} parent=5 // pred_fallthru
        _
      %p139 = scmp.le.s32.totalorder 1, %s12
      %p140 = scmp.lt.s32.totalorder %s12, 3
      %p141 = pnand %p139, %p140
      %p142 = pneg %p141
      // Predicated region
      $region29: #{tpu_custom_call.1} parent=5 // pred_check
        _
      $region30: #{tpu_custom_call.1} parent=5 // pred_check_branch
        %144 = sbr.rel (%p141) target = $region32
      $region31: #{tpu_custom_call.1} parent=5 // pred_region
        %s145 = ssub.s32 %s12, 1
        %p146 = scmp.lt.s32.totalorder %s17, 1
        %s147 = scalar_select %p146, %s17, 1
        %s148 = smul.addr %s147, 2
        %s149 = smul.addr %s148, 8
        %s150 = scalar_lea.vmem %s0, %s149
        %p151 = pneg %p38
        %p152 = pneg %p35
        %p153 = pneg %p59
        %p154 = pneg %p56
        %p155 = pneg %p80
        %p156 = pneg %p77
        %p157 = pneg %p106
        %p158 = pneg %p103
        %s159 = sand.u32 %s93, 1
        %s160 = scalar_lea.sflag [#allocation3], %s159
        %s161 = sand.u32 %s93, 1
        %s162 = smul.addr %s161, 8
        %s163 = scalar_lea.vmem [#allocation2], %s162
        %p164 = scmp.lt.s32.totalorder %s17, 1
        %s165 = scalar_select %p164, %s17, 1
        %s166 = smul.addr %s165, 2
        %s167 = smul.addr %s166, 8
        %s168 = scalar_lea.vmem %s0, %s167
        %v170 = vld [vmem:[%s168] sm:$0x1f]
        %v171 = vld [vmem:[%s168 + $0x8] sm:$0x1f]
        %v172 = vld [vmem:[%s1] sm:$0x7f]
        %v173 = vpack.c.bf16 %v172, %v172
        %v174 = vld [vmem:[%s2] sm:$0xf]
        %v175 = vpack.c.bf16 %v174, %v174
        %v176 = vpack.c.bf16 %v170, %v170
        %v177 = vpack.c.bf16 %v171, %v171
        %vm178 = vcmask 39936
        %v180 = vsel %vm178, %v173, 0
        %vm182 = vcmask 1041408
        %vm183 = vcmask 1042432
        %v184 = vsel %vm182, 4294967295, 65535
        %v185 = vsel %vm183, %v184, 0
        %v187 = vand.u32 %v176, %v185
        %v190 = vand.u32 %v177, %v185
        %192 = vmatprep.subr.bf16.mxu0 0
        %193 = vmatpush1.bf16.msra.mxu0 0
        %194 = vmatprep.subr.bf16.mxu0 0
        %195 = vmatpush1.bf16.msra.mxu0 0
        %196 = vmatprep.subr.bf16.mxu0 0
        %197 = vmatpush1.bf16.msra.mxu0 0
        %198 = vmatprep.subr.bf16.mxu0 0
        %199 = vmatpush1.bf16.msra.mxu0 0
        %200 = vmatprep.subr.bf16.mxu0 0
        %201 = vmatpush1.bf16.msra.mxu0 0
        %202 = vmatprep.subr.bf16.mxu0 0
        %203 = vmatpush1.bf16.msra.mxu0 0
        %204 = vmatprep.subr.bf16.mxu0 0
        %205 = vmatpush1.bf16.msra.mxu0 0
        %206 = vmatprep.subr.bf16.mxu0 %v190
        %207 = vmatpush1.bf16.msra.mxu0 %v187
        %208 = vmatprep.subr.bf16.mxu0 0
        %209 = vmatpush2.bf16.msra.mxu0 0
        %210 = vmatprep.subr.bf16.mxu0 0
        %211 = vmatpush2.bf16.msra.mxu0 0
        %212 = vmatprep.subr.bf16.mxu0 0
        %213 = vmatpush2.bf16.msra.mxu0 0
        %214 = vmatprep.subr.bf16.mxu0 0
        %215 = vmatpush2.bf16.msra.mxu0 0
        %216 = vmatprep.subr.bf16.mxu0 0
        %217 = vmatpush2.bf16.msra.mxu0 0
        %218 = vmatprep.subr.bf16.mxu0 0
        %219 = vmatpush2.bf16.msra.mxu0 0
        %220 = vmatprep.subr.bf16.mxu0 0
        %221 = vmatpush2.bf16.msra.mxu0 0
        %222 = vmatprep.subr.bf16.mxu0 0
        %223 = vmatpush2.bf16.msra.mxu0 0
        %224 = vmatprep.mubr.bf16.mxu0 0
        %225 = vmatmul.mubr.bf16.gmra.mxu0 %v180
        %v226 = vpop.f32.mrf.mxu0
        %v227 = vadd.f32 0.0, %v226
        %v228 = vpop.f32.mrf.mxu0
        %v229 = vadd.f32 0.0, %v228
        %v230 = vpop.f32.mrf.mxu0
        %v231 = vpop.f32.mrf.mxu0
        %232 = vdwg.mxu0
        %234 = vrot.lane.b32.xlu0 %v227, 64
        %v235 = vpop.permute.xlu0 %234
        %v237 = vmax.f32 %v227, %v235
        %v238 = vmax.f32 %v237, %v229
        %240 = vrot.lane.b32.xlu0 %v229, 64
        %v241 = vpop.permute.xlu0 %240
        %v243 = vmax.f32 %v238, %v241
        %v244 = vpack.c.bf16 %v243, %v243
        %v245 = vpack.c.bf16 %v227, %v227
        %v246 = vpack.c.bf16 %v229, %v229
        %v248 = vrot.slane %v244, 1
        %250 = vxpose.xlu0.c.b16.start [1/8] %v248, 128
        %251 = vxpose.xlu0.c.b16.cont [2/8] 0, 128
        %252 = vxpose.xlu0.c.b16.cont [3/8] 0, 128
        %253 = vxpose.xlu0.c.b16.cont [4/8] 0, 128
        %254 = vxpose.xlu0.c.b16.cont [5/8] 0, 128
        %255 = vxpose.xlu0.c.b16.cont [6/8] 0, 128
        %256 = vxpose.xlu0.c.b16.cont [7/8] 0, 128
        %257 = vxpose.xlu0.c.b16.end [8/8] 0, 128
        %v258 = vpop.trf.xlu0
        %v259 = vpop.trf.xlu0
        %v260 = vpop.trf.xlu0
        %v261 = vpop.trf.xlu0
        %v262 = vpop.trf.xlu0
        %v263 = vpop.trf.xlu0
        %v264 = vpop.trf.xlu0
        %v265 = vpop.trf.xlu0
        %vm266 = vcmask 15360
        %v268 = vsel %vm266, %v258, 0
        %v271 = vsel %vm266, %v259, 0
        %v274 = vsel %vm266, %v260, 0
        %v277 = vsel %vm266, %v261, 0
        %vm279 = vcmask 1040384
        %v281 = vsel %vm279, %v245, 0
        %v284 = vsel %vm279, %v246, 0
        %286 = vmatprep.subr.bf16.mxu0 0
        %287 = vmatpush1.bf16.msra.mxu0 0
        %288 = vmatprep.subr.bf16.mxu0 0
        %289 = vmatpush1.bf16.msra.mxu0 0
        %290 = vmatprep.subr.bf16.mxu0 0
        %291 = vmatpush1.bf16.msra.mxu0 0
        %292 = vmatprep.subr.bf16.mxu0 0
        %293 = vmatpush1.bf16.msra.mxu0 0
        %294 = vmatprep.subr.bf16.mxu0 0
        %295 = vmatpush1.bf16.msra.mxu0 0
        %296 = vmatprep.subr.bf16.mxu0 0
        %297 = vmatpush1.bf16.msra.mxu0 0
        %298 = vmatprep.subr.bf16.mxu0 0
        %299 = vmatpush1.bf16.msra.mxu0 0
        %300 = vmatprep.subr.bf16.mxu0 %v284
        %301 = vmatpush1.bf16.msra.mxu0 %v281
        %302 = vmatprep.subr.bf16.mxu0 0
        %303 = vmatpush2.bf16.msra.mxu0 0
        %304 = vmatprep.subr.bf16.mxu0 0
        %305 = vmatpush2.bf16.msra.mxu0 0
        %306 = vmatprep.subr.bf16.mxu0 0
        %307 = vmatpush2.bf16.msra.mxu0 0
        %308 = vmatprep.subr.bf16.mxu0 0
        %309 = vmatpush2.bf16.msra.mxu0 0
        %310 = vmatprep.subr.bf16.mxu0 0
        %311 = vmatpush2.bf16.msra.mxu0 0
        %312 = vmatprep.subr.bf16.mxu0 0
        %313 = vmatpush2.bf16.msra.mxu0 0
        %314 = vmatprep.subr.bf16.mxu0 0
        %315 = vmatpush2.bf16.msra.mxu0 0
        %316 = vmatprep.subr.bf16.mxu0 0
        %317 = vmatpush2.bf16.msra.mxu0 0
        %318 = vmatprep.mubr.bf16.mxu0 0
        %319 = vmatmul.mubr.bf16.gmra.mxu0 %v268
        %v320 = vpop.f32.mrf.mxu0
        %v321 = vadd.f32 0.0, %v320
        %v322 = vpop.f32.mrf.mxu0
        %v323 = vadd.f32 0.0, %v322
        %v324 = vpop.f32.mrf.mxu0
        %v325 = vadd.f32 0.0, %v324
        %v326 = vpop.f32.mrf.mxu0
        %v327 = vadd.f32 0.0, %v326
        %328 = vmatprep.mubr.bf16.mxu0 0
        %329 = vmatmul.mubr.bf16.gmra.mxu0 %v271
        %v330 = vpop.f32.mrf.mxu0
        %v331 = vadd.f32 0.0, %v330
        %v332 = vpop.f32.mrf.mxu0
        %v333 = vadd.f32 0.0, %v332
        %v334 = vpop.f32.mrf.mxu0
        %v335 = vadd.f32 0.0, %v334
        %v336 = vpop.f32.mrf.mxu0
        %v337 = vadd.f32 0.0, %v336
        %338 = vmatprep.mubr.bf16.mxu0 0
        %339 = vmatmul.mubr.bf16.gmra.mxu0 %v274
        %v340 = vpop.f32.mrf.mxu0
        %v341 = vadd.f32 0.0, %v340
        %v342 = vpop.f32.mrf.mxu0
        %v343 = vadd.f32 0.0, %v342
        %v344 = vpop.f32.mrf.mxu0
        %v345 = vadd.f32 0.0, %v344
        %v346 = vpop.f32.mrf.mxu0
        %v347 = vadd.f32 0.0, %v346
        %348 = vmatprep.mubr.bf16.mxu0 0
        %349 = vmatmul.mubr.bf16.gmra.mxu0 %v277
        %v350 = vpop.f32.mrf.mxu0
        %v351 = vadd.f32 0.0, %v350
        %v352 = vpop.f32.mrf.mxu0
        %v353 = vadd.f32 0.0, %v352
        %v354 = vpop.f32.mrf.mxu0
        %v355 = vadd.f32 0.0, %v354
        %v356 = vpop.f32.mrf.mxu0
        %v357 = vadd.f32 0.0, %v356
        %358 = vdwg.mxu0
        %v359 = vmax.f32 %v321, %v331
        %v360 = vmax.f32 %v325, %v335
        %v361 = vmax.f32 %v359, %v341
        %v362 = vmax.f32 %v360, %v345
        %v363 = vmax.f32 %v361, %v351
        %v364 = vmax.f32 %v362, %v355
        %v365 = vmax.f32 %v363, %v364
        %v366 = vrot.slane %v365, 4
        %v367 = vmax.f32 %v365, %v366
        %v368 = vrot.slane %v367, 2
        %v369 = vmax.f32 %v367, %v368
        %v370 = vrot.slane %v369, 1
        %v371 = vmax.f32 %v369, %v370
        %v372 = vmax.f32 %v323, %v333
        %v373 = vmax.f32 %v327, %v337
        %v374 = vmax.f32 %v372, %v343
        %v375 = vmax.f32 %v373, %v347
        %v376 = vmax.f32 %v374, %v353
        %v377 = vmax.f32 %v375, %v357
        %v378 = vmax.f32 %v376, %v377
        %v379 = vrot.slane %v378, 4
        %v380 = vmax.f32 %v378, %v379
        %v381 = vrot.slane %v380, 2
        %v382 = vmax.f32 %v380, %v381
        %v383 = vrot.slane %v382, 1
        %v384 = vmax.f32 %v382, %v383
        %v385 = vsub.f32 %v321, %v371
        %v386 = vsub.f32 %v323, %v384
        %v387 = vsub.f32 %v325, %v371
        %v388 = vsub.f32 %v327, %v384
        %v389 = vsub.f32 %v331, %v371
        %v390 = vsub.f32 %v333, %v384
        %v391 = vsub.f32 %v335, %v371
        %v392 = vsub.f32 %v337, %v384
        %v393 = vsub.f32 %v341, %v371
        %v394 = vsub.f32 %v343, %v384
        %v395 = vsub.f32 %v345, %v371
        %v396 = vsub.f32 %v347, %v384
        %v397 = vsub.f32 %v351, %v371
        %v398 = vsub.f32 %v353, %v384
        %v399 = vsub.f32 %v355, %v371
        %v400 = vsub.f32 %v357, %v384
        %v401 = vmul.f32 %v385, 1.442695
        %v402 = vpow.pop %v401
        %v403 = vmul.f32 %v386, 1.442695
        %v404 = vpow.pop %v403
        %v405 = vmul.f32 %v387, 1.442695
        %v406 = vpow.pop %v405
        %v407 = vmul.f32 %v388, 1.442695
        %v408 = vpow.pop %v407
        %v409 = vmul.f32 %v389, 1.442695
        %v410 = vpow.pop %v409
        %v411 = vmul.f32 %v390, 1.442695
        %v412 = vpow.pop %v411
        %v413 = vmul.f32 %v391, 1.442695
        %v414 = vpow.pop %v413
        %v415 = vmul.f32 %v392, 1.442695
        %v416 = vpow.pop %v415
        %v417 = vmul.f32 %v393, 1.442695
        %v418 = vpow.pop %v417
        %v419 = vmul.f32 %v394, 1.442695
        %v420 = vpow.pop %v419
        %v421 = vmul.f32 %v395, 1.442695
        %v422 = vpow.pop %v421
        %v423 = vmul.f32 %v396, 1.442695
        %v424 = vpow.pop %v423
        %v425 = vmul.f32 %v397, 1.442695
        %v426 = vpow.pop %v425
        %v427 = vmul.f32 %v398, 1.442695
        %v428 = vpow.pop %v427
        %v429 = vmul.f32 %v399, 1.442695
        %v430 = vpow.pop %v429
        %v431 = vmul.f32 %v400, 1.442695
        %v432 = vpow.pop %v431
        %v433 = vpack.c.bf16 %v406, %v402
        %v434 = vpack.c.bf16 %v408, %v404
        %v435 = vpack.c.bf16 %v414, %v410
        %v436 = vpack.c.bf16 %v416, %v412
        %v437 = vpack.c.bf16 %v422, %v418
        %v438 = vpack.c.bf16 %v424, %v420
        %v439 = vpack.c.bf16 %v430, %v426
        %v440 = vpack.c.bf16 %v432, %v428
        %v441 = vrot.slane %v244, 2
        %vm442 = vcmask 523264
        %v444 = vsel %vm442, %v441, 0
        %446 = vmatprep.subr.bf16.mxu0 0
        %447 = vmatpush1.bf16.msra.mxu0 0
        %448 = vmatprep.subr.bf16.mxu0 0
        %449 = vmatpush1.bf16.msra.mxu0 0
        %450 = vmatprep.subr.bf16.mxu0 0
        %451 = vmatpush1.bf16.msra.mxu0 0
        %452 = vmatprep.subr.bf16.mxu0 0
        %453 = vmatpush1.bf16.msra.mxu0 0
        %454 = vmatprep.subr.bf16.mxu0 %v440
        %455 = vmatpush1.bf16.msra.mxu0 %v439
        %456 = vmatprep.subr.bf16.mxu0 %v438
        %457 = vmatpush1.bf16.msra.mxu0 %v437
        %458 = vmatprep.subr.bf16.mxu0 %v436
        %459 = vmatpush1.bf16.msra.mxu0 %v435
        %460 = vmatprep.subr.bf16.mxu0 %v434
        %461 = vmatpush1.bf16.msra.mxu0 %v433
        %462 = vmatprep.subr.bf16.mxu0 0
        %463 = vmatpush2.bf16.msra.mxu0 0
        %464 = vmatprep.subr.bf16.mxu0 0
        %465 = vmatpush2.bf16.msra.mxu0 0
        %466 = vmatprep.subr.bf16.mxu0 0
        %467 = vmatpush2.bf16.msra.mxu0 0
        %468 = vmatprep.subr.bf16.mxu0 0
        %469 = vmatpush2.bf16.msra.mxu0 0
        %470 = vmatprep.subr.bf16.mxu0 0
        %471 = vmatpush2.bf16.msra.mxu0 0
        %472 = vmatprep.subr.bf16.mxu0 0
        %473 = vmatpush2.bf16.msra.mxu0 0
        %474 = vmatprep.subr.bf16.mxu0 0
        %475 = vmatpush2.bf16.msra.mxu0 0
        %476 = vmatprep.subr.bf16.mxu0 0
        %477 = vmatpush2.bf16.msra.mxu0 0
        %478 = vmatprep.mubr.bf16.mxu0 0
        %479 = vmatmul.mubr.bf16.gmra.mxu0 %v444
        %v480 = vpop.f32.mrf.mxu0
        %v481 = vadd.f32 0.0, %v480
        %v482 = vpop.f32.mrf.mxu0
        %v483 = vadd.f32 0.0, %v482
        %v484 = vpop.f32.mrf.mxu0
        %v485 = vpop.f32.mrf.mxu0
        %486 = vdwg.mxu0
        %v487 = vrcp.pop %v481
        %v488 = vrcp.pop %v483
        %v489 = vlaneseq
        %v490 = vshrl.u32 %v489, 7
        %v491 = vsub.s32 2, %v490
        %v492 = vrot.slane %v487, %v491
        %v493 = vlaneseq
        %v494 = vshrl.u32 %v493, 7
        %v495 = vsub.s32 2, %v494
        %v496 = vrot.slane %v488, %v495
        %v497 = vmul.f32 %v481, %v492
        %v498 = vmul.f32 %v483, %v496
        %v499 = vpack.c.bf16 %v497, %v497
        %v500 = vpack.c.bf16 %v498, %v498
        %vm501 = vcmask 23552
        %v503 = vsel %vm501, %v175, 0
        %v505 = vsel %vm279, 4294967295, 65535
        %v506 = vsel %vm182, %v505, 0
        %v508 = vand.u32 %v499, %v506
        %v511 = vand.u32 %v500, %v506
        %513 = vmatprep.subr.bf16.mxu0 0
        %514 = vmatpush1.bf16.msra.mxu0 0
        %515 = vmatprep.subr.bf16.mxu0 0
        %516 = vmatpush1.bf16.msra.mxu0 0
        %517 = vmatprep.subr.bf16.mxu0 0
        %518 = vmatpush1.bf16.msra.mxu0 0
        %519 = vmatprep.subr.bf16.mxu0 0
        %520 = vmatpush1.bf16.msra.mxu0 0
        %521 = vmatprep.subr.bf16.mxu0 0
        %522 = vmatpush1.bf16.msra.mxu0 0
        %523 = vmatprep.subr.bf16.mxu0 0
        %524 = vmatpush1.bf16.msra.mxu0 0
        %525 = vmatprep.subr.bf16.mxu0 0
        %526 = vmatpush1.bf16.msra.mxu0 0
        %527 = vmatprep.subr.bf16.mxu0 %v511
        %528 = vmatpush1.bf16.msra.mxu0 %v508
        %529 = vmatprep.subr.bf16.mxu0 0
        %530 = vmatpush2.bf16.msra.mxu0 0
        %531 = vmatprep.subr.bf16.mxu0 0
        %532 = vmatpush2.bf16.msra.mxu0 0
        %533 = vmatprep.subr.bf16.mxu0 0
        %534 = vmatpush2.bf16.msra.mxu0 0
        %535 = vmatprep.subr.bf16.mxu0 0
        %536 = vmatpush2.bf16.msra.mxu0 0
        %537 = vmatprep.subr.bf16.mxu0 0
        %538 = vmatpush2.bf16.msra.mxu0 0
        %539 = vmatprep.subr.bf16.mxu0 0
        %540 = vmatpush2.bf16.msra.mxu0 0
        %541 = vmatprep.subr.bf16.mxu0 0
        %542 = vmatpush2.bf16.msra.mxu0 0
        %543 = vmatprep.subr.bf16.mxu0 0
        %544 = vmatpush2.bf16.msra.mxu0 0
        %545 = vmatprep.mubr.bf16.mxu0 0
        %546 = vmatmul.mubr.bf16.gmra.mxu0 %v503
        %v547 = vpop.f32.mrf.mxu0
        %v548 = vadd.f32 %v170, %v547
        %v549 = vpop.f32.mrf.mxu0
        %v550 = vadd.f32 %v171, %v549
        %v551 = vpop.f32.mrf.mxu0
        %v552 = vpop.f32.mrf.mxu0
        %553 = vdwg.mxu0
        %v556 = vcombine.low %v548, %v550
        %558 = vst [vmem:[%s163] sm:$0xff] %v556
        %s559 = sand.u32 %s93, 1
        %s560 = scalar_lea.sflag [#allocation3], %s559
        %s561 = sand.u32 %s93, 1
        %s562 = smul.addr %s561, 8
        %s563 = scalar_lea.vmem [#allocation2], %s562
        // Predicated region
        $region33: #{tpu_custom_call.1} parent=31 // pred_check
          %p564 = pneg %p103
        $region34: #{tpu_custom_call.1} parent=31 // pred_check_branch
          %566 = sbr.rel (%p564) target = $region36
        $region35: #{tpu_custom_call.1} parent=31 // pred_region
          %s568 = ssub.s32 128, 128
          %569 = vsyncadd %s560, %s568
          %s570 = smul.addr %s17, 2
          %s571 = smul.addr %s570, 64
          %s572 = scalar_lea.hbm %s3, %s571
          %s574 = sshll.u32 %s563, 4
          %s575 = int_to_ptr.vmem [resolvable:$true] %s574
          %577 = dma.vmem_to_hbm [thread:$0]  %s575, 128, %s572, %s560
        $region36: #{tpu_custom_call.1} parent=31 // pred_fallthru
          _
      $region32: #{tpu_custom_call.1} parent=5 // pred_fallthru
        _
      %p578 = scmp.le.s32.totalorder 2, %s12
      // Predicated region
      $region37: #{tpu_custom_call.1} parent=5 // pred_check
        %p579 = pneg %p578
      $region38: #{tpu_custom_call.1} parent=5 // pred_check_branch
        %581 = sbr.rel (%p579) target = $region40
      $region39: #{tpu_custom_call.1} parent=5 // pred_region
        %s582 = ssub.s32 %s12, 2
        // Predicated region
        $region41: #{tpu_custom_call.1} parent=39 // pred_check
          %p583 = pneg %p109
        $region42: #{tpu_custom_call.1} parent=39 // pred_check_branch
          %585 = sbr.rel (%p583) target = $region44
        $region43: #{tpu_custom_call.1} parent=39 // pred_region
          %s586 = sand.u32 %s94, 1
          %s587 = scalar_lea.sflag [#allocation3], %s586
          %s588 = sand.u32 %s94, 1
          %s589 = smul.addr %s588, 8
          %s590 = scalar_lea.vmem [#allocation2], %s589
          %591 = dma.done %s587, 128
        $region44: #{tpu_custom_call.1} parent=39 // pred_fallthru
          _
      $region40: #{tpu_custom_call.1} parent=5 // pred_fallthru
        _
    $region6: #{tpu_custom_call.1} parent=1 // loop_footer
      %s16 = sadd.s32 1, %s12
    $region7: #{tpu_custom_call.1} parent=1 // loop_footer_branch
      %11 = sbr.rel target = $region3
    $region8: #{tpu_custom_call.1} parent=1 // loop_exit
      _
    %592 = vsyncpa [#allocation3], 1
    %s593 = scalar_lea.sflag [#allocation3], 1
    %594 = vsyncpa %s593, 1

</llo_original>
